<compile_context>
chip_gen: v6e
topology: v6e:2x2x1
jax: 0.10.0
libtpu: 0.0.40
codegen_flags: <defaults>
</compile_context>

<pallas_src>
import functools

import jax
import jax.numpy as jnp
from jax.experimental import pallas as pl
from jax.experimental.pallas import tpu as pltpu

LANE = 128
SUBLANE = 8


def _round_up(n, m):
    return ((n + m - 1) // m) * m


def policy_net_kernel(x_ref, w1_ref, b1_ref, w2_ref, b2_ref, w3_ref, b3_ref,
                      out_ref, *, act_dims):
    x = x_ref[...]                               # (TB, obs) f32

    # shared_net: three Linear+Tanh layers (MXU matmuls + VPU/EUP tanh).
    h1 = jnp.tanh(
        jnp.dot(x, w1_ref[...], preferred_element_type=jnp.float32)
        + b1_ref[...])                           # (TB, 16)
    h2 = jnp.tanh(
        jnp.dot(h1, w2_ref[...], preferred_element_type=jnp.float32)
        + b2_ref[...])                           # (TB, 32)
    h3 = jnp.tanh(
        jnp.dot(h2, w3_ref[...], preferred_element_type=jnp.float32)
        + b3_ref[...])                           # (TB, N_PAD) lane-aligned slab

    # policy_softmax over the real action columns only.  Padded W3/b3 columns
    # give h3 = tanh(0) = 0 there, so they must be masked out of max/sum.
    col = jax.lax.broadcasted_iota(jnp.int32, h3.shape, dimension=1)
    valid = col < act_dims
    h3m = jnp.where(valid, h3, jnp.full_like(h3, -1e30))
    m = jnp.max(h3m, axis=-1, keepdims=True)
    e = jnp.exp(h3m - m)                         # padded lanes -> ~0
    denom = jnp.sum(e, axis=-1, keepdims=True)
    probs = e / denom                            # exact divide (correctness)

    # Store only the real action columns (narrow HBM writeback).
    out_ref[...] = probs[:, :act_dims]


def policy_network_forward(x, params, *, tb_max=4096):
    """x: (B, obs_dims); params: dict of (in,out) weights / (1,out) biases."""
    x = x.astype(jnp.float32)                    # mirrors x.float() in the spec
    batch, obs = x.shape
    act_dims = params["w3"].shape[1]
    n_pad = _round_up(act_dims, LANE)            # internal compute width

    # Even tile splitting: at most ~num_tiles*7 rows of padding, never a
    # near-empty trailing tile.  Use >=2 tiles when possible so the
    # "parallel" axis can shard across both v7x TensorCores.
    num_tiles = pl.cdiv(batch, tb_max)
    if batch >= 2 * SUBLANE:
        num_tiles = max(num_tiles, 2)
    tb = _round_up(pl.cdiv(batch, num_tiles), SUBLANE)
    b_pad = num_tiles * tb

    if b_pad != batch:
        x = jnp.pad(x, ((0, b_pad - batch), (0, 0)))

    w1, b1 = params["w1"], params["b1"]
    w2, b2 = params["w2"], params["b2"]
    w3, b3 = params["w3"], params["b3"]
    if n_pad != act_dims:
        # Zero-padded columns => h3 padded lanes = tanh(0) = 0, masked in-kernel.
        w3 = jnp.pad(w3, ((0, 0), (0, n_pad - act_dims)))
        b3 = jnp.pad(b3, ((0, 0), (0, n_pad - act_dims)))

    grid = (num_tiles,)
    # Weights/biases: whole-array blocks, same block every grid step
    # (stay resident in VMEM across the batch loop).
    resident = lambda a: pl.BlockSpec(a.shape, lambda i: (0, 0))

    out = pl.pallas_call(
        functools.partial(policy_net_kernel, act_dims=act_dims),
        out_shape=jax.ShapeDtypeStruct((b_pad, act_dims), jnp.float32),
        grid=grid,
        in_specs=[
            pl.BlockSpec((tb, obs), lambda i: (i, 0)),     # x: batch-tiled
            resident(w1), resident(b1),
            resident(w2), resident(b2),
            resident(w3), resident(b3),
        ],
        out_specs=pl.BlockSpec((tb, act_dims), lambda i: (i, 0)),
        compiler_params=pltpu.CompilerParams(
            dimension_semantics=("parallel",)),
    )(x, w1, b1, w2, b2, w3, b3)

    return out[:batch, :]


def init_params(key, obs_space_dims, action_space_dims):
    h1, h2 = 16, 32
    ks = jax.random.split(key, 6)

    def linear(kw, kb, fan_in, fan_out):
        # PyTorch nn.Linear default init: U(-1/sqrt(fan_in), 1/sqrt(fan_in))
        bound = 1.0 / jnp.sqrt(jnp.float32(fan_in))
        w = jax.random.uniform(kw, (fan_in, fan_out), jnp.float32,
                               minval=-bound, maxval=bound)
        b = jax.random.uniform(kb, (1, fan_out), jnp.float32,
                               minval=-bound, maxval=bound)
        return w, b

    w1, b1 = linear(ks[0], ks[1], obs_space_dims, h1)
    w2, b2 = linear(ks[2], ks[3], h1, h2)
    w3, b3 = linear(ks[4], ks[5], h2, action_space_dims)
    return {"w1": w1, "b1": b1, "w2": w2, "b2": b2, "w3": w3, "b3": b3}


def reference_forward(x, p):
    h = jnp.tanh(x @ p["w1"] + p["b1"])
    h = jnp.tanh(h @ p["w2"] + p["b2"])
    h = jnp.tanh(h @ p["w3"] + p["b3"])
    return jax.nn.softmax(h, axis=1)


if __name__ == "__main__":
    obs_space_dims = 4      # e.g. CartPole observation dim
    action_space_dims = 2   # e.g. CartPole action dim

    key = jax.random.PRNGKey(0)
    k_params, k_x1, k_x2, k_x3 = jax.random.split(key, 4)
    params = init_params(k_params, obs_space_dims, action_space_dims)

    # Aligned small batch (single tile).
    x = jax.random.normal(k_x1, (8, obs_space_dims), dtype=jnp.float32)
    out = jax.block_until_ready(policy_network_forward(x, params))
    ref = reference_forward(x, params)
    assert out.shape == (8, action_space_dims)
    assert jnp.allclose(out, ref, atol=1e-4, rtol=1e-4), "mismatch vs reference"
    assert jnp.allclose(jnp.sum(out, axis=1), 1.0, atol=1e-4), "rows must sum to 1"

    # Non-aligned batch exercises the batch-padding path.
    x2 = jax.random.normal(k_x2, (10, obs_space_dims), dtype=jnp.float32)
    out2 = jax.block_until_ready(policy_network_forward(x2, params))
    ref2 = reference_forward(x2, params)
    assert out2.shape == (10, action_space_dims)
    assert jnp.allclose(out2, ref2, atol=1e-4, rtol=1e-4), "mismatch (ragged batch)"

    # Multi-tile path (>= 2 grid steps; padding + even tile split).
    x3 = jax.random.normal(k_x3, (40, obs_space_dims), dtype=jnp.float32)
    out3 = jax.block_until_ready(policy_network_forward(x3, params))
    ref3 = reference_forward(x3, params)
    assert out3.shape == (40, action_space_dims)
    assert jnp.allclose(out3, ref3, atol=1e-4, rtol=1e-4), "mismatch (multi-tile)"
    assert jnp.allclose(jnp.sum(out3, axis=1), 1.0, atol=1e-4), "rows must sum to 1"

    print("KERNEL_OK")
</pallas_src>

<mosaic_0001>
module attributes {stable_mosaic.version = 11 : i64} {
  func.func @policy_net_kernel(%arg0: i32, %arg1: memref<8x4xf32, #tpu.memory_space<vmem>>, %arg2: memref<4x16xf32, #tpu.memory_space<vmem>>, %arg3: memref<1x16xf32, #tpu.memory_space<vmem>>, %arg4: memref<16x32xf32, #tpu.memory_space<vmem>>, %arg5: memref<1x32xf32, #tpu.memory_space<vmem>>, %arg6: memref<32x128xf32, #tpu.memory_space<vmem>>, %arg7: memref<1x128xf32, #tpu.memory_space<vmem>>, %arg8: memref<8x2xf32, #tpu.memory_space<vmem>>) attributes {dimension_semantics = [#tpu.dimension_semantics<parallel>], iteration_bounds = array<i64: 1>, scalar_prefetch = 0 : i64, scratch_operands = 0 : i64, tpu.core_type = #tpu.core_type<tc>, window_params = [{transform_indices = @transform_0, window_bounds = array<i64: 8, 4>}, {pipeline_mode = #tpu.pipeline_mode<synchronous>, transform_indices = @transform_1, window_bounds = array<i64: 4, 16>}, {pipeline_mode = #tpu.pipeline_mode<synchronous>, transform_indices = @transform_2, window_bounds = array<i64: 1, 16>}, {pipeline_mode = #tpu.pipeline_mode<synchronous>, transform_indices = @transform_3, window_bounds = array<i64: 16, 32>}, {pipeline_mode = #tpu.pipeline_mode<synchronous>, transform_indices = @transform_4, window_bounds = array<i64: 1, 32>}, {pipeline_mode = #tpu.pipeline_mode<synchronous>, transform_indices = @transform_5, window_bounds = array<i64: 32, 128>}, {pipeline_mode = #tpu.pipeline_mode<synchronous>, transform_indices = @transform_6, window_bounds = array<i64: 1, 128>}, {transform_indices = @transform_7, window_bounds = array<i64: 8, 2>}]} {
    %c0 = arith.constant 0 : index
    %c0_0 = arith.constant 0 : index
    %0 = vector.load %arg1[%c0, %c0_0] : memref<8x4xf32, #tpu.memory_space<vmem>>, vector<8x4xf32>
    %c0_1 = arith.constant 0 : index
    %c0_2 = arith.constant 0 : index
    %1 = vector.load %arg2[%c0_1, %c0_2] : memref<4x16xf32, #tpu.memory_space<vmem>>, vector<4x16xf32>
    %cst = arith.constant dense<0.000000e+00> : vector<8x16xf32>
    %2 = tpu.matmul %0, %1, %cst {dimension_numbers = #tpu.dot_dimension_numbers<[1], [0], [0], [1], [0, 0, 1, 1], [], []>} : vector<8x4xf32>, vector<4x16xf32>, vector<8x16xf32> -> vector<8x16xf32>
    %c0_3 = arith.constant 0 : index
    %c0_4 = arith.constant 0 : index
    %3 = vector.load %arg3[%c0_3, %c0_4] : memref<1x16xf32, #tpu.memory_space<vmem>>, vector<1x16xf32>
    %4 = vector.broadcast %3 : vector<1x16xf32> to vector<8x16xf32>
    %5 = arith.addf %2, %4 : vector<8x16xf32>
    %6 = math.tanh %5 : vector<8x16xf32>
    %c0_5 = arith.constant 0 : index
    %c0_6 = arith.constant 0 : index
    %7 = vector.load %arg4[%c0_5, %c0_6] : memref<16x32xf32, #tpu.memory_space<vmem>>, vector<16x32xf32>
    %cst_7 = arith.constant dense<0.000000e+00> : vector<8x32xf32>
    %8 = tpu.matmul %6, %7, %cst_7 {dimension_numbers = #tpu.dot_dimension_numbers<[1], [0], [0], [1], [0, 0, 1, 1], [], []>} : vector<8x16xf32>, vector<16x32xf32>, vector<8x32xf32> -> vector<8x32xf32>
    %c0_8 = arith.constant 0 : index
    %c0_9 = arith.constant 0 : index
    %9 = vector.load %arg5[%c0_8, %c0_9] : memref<1x32xf32, #tpu.memory_space<vmem>>, vector<1x32xf32>
    %10 = vector.broadcast %9 : vector<1x32xf32> to vector<8x32xf32>
    %11 = arith.addf %8, %10 : vector<8x32xf32>
    %12 = math.tanh %11 : vector<8x32xf32>
    %c0_10 = arith.constant 0 : index
    %c0_11 = arith.constant 0 : index
    %13 = vector.load %arg6[%c0_10, %c0_11] : memref<32x128xf32, #tpu.memory_space<vmem>>, vector<32x128xf32>
    %cst_12 = arith.constant dense<0.000000e+00> : vector<8x128xf32>
    %14 = tpu.matmul %12, %13, %cst_12 {dimension_numbers = #tpu.dot_dimension_numbers<[1], [0], [0], [1], [0, 0, 1, 1], [], []>} : vector<8x32xf32>, vector<32x128xf32>, vector<8x128xf32> -> vector<8x128xf32>
    %c0_13 = arith.constant 0 : index
    %c0_14 = arith.constant 0 : index
    %15 = vector.load %arg7[%c0_13, %c0_14] : memref<1x128xf32, #tpu.memory_space<vmem>>, vector<1x128xf32>
    %16 = vector.broadcast %15 : vector<1x128xf32> to vector<8x128xf32>
    %17 = arith.addf %14, %16 : vector<8x128xf32>
    %18 = math.tanh %17 : vector<8x128xf32>
    %19 = tpu.iota {dimensions = array<i32: 1>} : vector<8x128xi32>
    %c2_i32 = arith.constant 2 : i32
    %20 = vector.broadcast %c2_i32 : i32 to vector<8x128xi32>
    %21 = arith.cmpi slt, %19, %20 : vector<8x128xi32>
    %cst_15 = arith.constant -1.000000e+30 : f32
    %22 = vector.broadcast %cst_15 : f32 to vector<8x128xf32>
    %23 = arith.select %21, %18, %22 : vector<8x128xi1>, vector<8x128xf32>
    %cst_16 = arith.constant dense<0xFF800000> : vector<8xf32>
    %24 = vector.multi_reduction <maximumf>, %23, %cst_16 [1] : vector<8x128xf32> to vector<8xf32>
    %25 = vector.shape_cast %24 : vector<8xf32> to vector<8x1xf32>
    %26 = vector.broadcast %25 : vector<8x1xf32> to vector<8x128xf32>
    %27 = arith.subf %23, %26 : vector<8x128xf32>
    %28 = math.exp %27 : vector<8x128xf32>
    %cst_17 = arith.constant dense<0.000000e+00> : vector<8xf32>
    %29 = vector.multi_reduction <add>, %28, %cst_17 [1] : vector<8x128xf32> to vector<8xf32>
    %30 = vector.shape_cast %29 : vector<8xf32> to vector<8x1xf32>
    %31 = vector.broadcast %30 : vector<8x1xf32> to vector<8x128xf32>
    %32 = arith.divf %28, %31 : vector<8x128xf32>
    %33 = vector.extract_strided_slice %32 {offsets = [0, 0], sizes = [8, 2], strides = [1, 1]} : vector<8x128xf32> to vector<8x2xf32>
    %c0_18 = arith.constant 0 : index
    %c0_19 = arith.constant 0 : index
    %34 = vector.load %arg8[%c0_18, %c0_19] : memref<8x2xf32, #tpu.memory_space<vmem>>, vector<8x2xf32>
    tpu.vector_store %arg8[%c0_18, %c0_19], %33 {strides = array<i32>} : memref<8x2xf32, #tpu.memory_space<vmem>>, vector<8x2xf32>,
    return
  }
  func.func @transform_0(%arg0: i32) -> (i32, i32) {
    %c0_i32 = arith.constant 0 : i32
    %c0_i32_0 = arith.constant 0 : i32
    return %arg0, %c0_i32 : i32, i32
  }
  func.func @transform_1(%arg0: i32) -> (i32, i32) {
    %c0_i32 = arith.constant 0 : i32
    %c0_i32_0 = arith.constant 0 : i32
    %c0_i32_1 = arith.constant 0 : i32
    return %c0_i32, %c0_i32_0 : i32, i32
  }
  func.func @transform_2(%arg0: i32) -> (i32, i32) {
    %c0_i32 = arith.constant 0 : i32
    %c0_i32_0 = arith.constant 0 : i32
    %c0_i32_1 = arith.constant 0 : i32
    return %c0_i32, %c0_i32_0 : i32, i32
  }
  func.func @transform_3(%arg0: i32) -> (i32, i32) {
    %c0_i32 = arith.constant 0 : i32
    %c0_i32_0 = arith.constant 0 : i32
    %c0_i32_1 = arith.constant 0 : i32
    return %c0_i32, %c0_i32_0 : i32, i32
  }
  func.func @transform_4(%arg0: i32) -> (i32, i32) {
    %c0_i32 = arith.constant 0 : i32
    %c0_i32_0 = arith.constant 0 : i32
    %c0_i32_1 = arith.constant 0 : i32
    return %c0_i32, %c0_i32_0 : i32, i32
  }
  func.func @transform_5(%arg0: i32) -> (i32, i32) {
    %c0_i32 = arith.constant 0 : i32
    %c0_i32_0 = arith.constant 0 : i32
    %c0_i32_1 = arith.constant 0 : i32
    return %c0_i32, %c0_i32_0 : i32, i32
  }
  func.func @transform_6(%arg0: i32) -> (i32, i32) {
    %c0_i32 = arith.constant 0 : i32
    %c0_i32_0 = arith.constant 0 : i32
    %c0_i32_1 = arith.constant 0 : i32
    return %c0_i32, %c0_i32_0 : i32, i32
  }
  func.func @transform_7(%arg0: i32) -> (i32, i32) {
    %c0_i32 = arith.constant 0 : i32
    %c0_i32_0 = arith.constant 0 : i32
    return %arg0, %c0_i32 : i32, i32
  }
}

</mosaic_0001>

<llo_original>
// kernel: tpu_custom_call.1
$region0: #{tpu_custom_call.1}
  #allocation0 [shape = 'u32[]', space=smem, size = 0x4, offset = 0x4, fixed_abs, tag = 'smem constant byte address 0x4 - core index']
  #allocation1 [shape = 'u32[144,128]{1,0:T(1,128)}', space=vmem, size = 0x12000, scoped, tag = 'internal scratch']
  %s0 = inlined_call_operand.vmem [shape: f32[8,4], index: 0, kind: input, shape index: {}]
  %s1 = inlined_call_operand.hbm [shape: f32[4,16], index: 1, kind: input, shape index: {}]
  %s2 = inlined_call_operand.vmem [shape: f32[1,16], index: 2, kind: input, shape index: {}]
  %s3 = inlined_call_operand.vmem [shape: f32[16,32], index: 3, kind: input, shape index: {}]
  %s4 = inlined_call_operand.vmem [shape: f32[1,32], index: 4, kind: input, shape index: {}]
  %s5 = inlined_call_operand.hbm [shape: f32[32,128], index: 5, kind: input, shape index: {}]
  %s6 = inlined_call_operand.vmem [shape: f32[1,128], index: 6, kind: input, shape index: {}]
  %s7 = inlined_call_operand.vmem [shape: f32[8,2], index: 7, kind: output, shape index: {}]
  %s8 = sld [smem:[#allocation0]]
  $region46: #{tpu_custom_call.1} parent=0
    _
  %s10 = ssub.s32 1, %s8
  %s11 = scalar_select 0, %s10, %s8
  $region1: #{tpu_custom_call.1} parent=0
    #allocation2 [shape = 'u8[2048]{0}', space=vmem, size = 0x800, scoped, tag = 'input window, operand 1, single buffered']
    #allocation3 [shape = 's32[1]{0}', space=sflag, size = 0x4, scoped, tag = 'scoped memory for tpu_custom_call.1']
    #allocation4 [shape = 'u8[16384]{0}', space=vmem, size = 0x4000, scoped, tag = 'input window, operand 5, single buffered']
    #allocation5 [shape = 's32[1]{0}', space=sflag, size = 0x4, scoped, tag = 'scoped memory for tpu_custom_call.1']
    %12 = vsyncpa [#allocation3], 0
    %13 = vsyncpa [#allocation5], 0
    // Predicated region
    $region2: #{tpu_custom_call.1} parent=1 // pred_check
      _
    $region3: #{tpu_custom_call.1} parent=1 // pred_check_branch
      %15 = sbr.rel (0) target = $region5
    $region4: #{tpu_custom_call.1} parent=1 // pred_region
      _
    $region5: #{tpu_custom_call.1} parent=1 // pred_fallthru
      _
    // Predicated region
    $region6: #{tpu_custom_call.1} parent=1 // pred_check
      _
    $region7: #{tpu_custom_call.1} parent=1 // pred_check_branch
      %17 = sbr.rel (0) target = $region9
    $region8: #{tpu_custom_call.1} parent=1 // pred_region
      %s19 = ssub.s32 64, 64
      %20 = vsyncadd [#allocation3], %s19
      %s22 = sshll.u32 [#allocation2], 4
      %s23 = int_to_ptr.vmem [resolvable:$true] %s22
      %25 = dma.hbm_to_vmem [thread:$0]  %s1, 64, %s23, [#allocation3]
    $region9: #{tpu_custom_call.1} parent=1 // pred_fallthru
      _
    // Predicated region
    $region10: #{tpu_custom_call.1} parent=1 // pred_check
      _
    $region11: #{tpu_custom_call.1} parent=1 // pred_check_branch
      %27 = sbr.rel (0) target = $region13
    $region12: #{tpu_custom_call.1} parent=1 // pred_region
      _
    $region13: #{tpu_custom_call.1} parent=1 // pred_fallthru
      _
    // Predicated region
    $region14: #{tpu_custom_call.1} parent=1 // pred_check
      _
    $region15: #{tpu_custom_call.1} parent=1 // pred_check_branch
      %29 = sbr.rel (0) target = $region17
    $region16: #{tpu_custom_call.1} parent=1 // pred_region
      _
    $region17: #{tpu_custom_call.1} parent=1 // pred_fallthru
      _
    // Predicated region
    $region18: #{tpu_custom_call.1} parent=1 // pred_check
      _
    $region19: #{tpu_custom_call.1} parent=1 // pred_check_branch
      %31 = sbr.rel (0) target = $region21
    $region20: #{tpu_custom_call.1} parent=1 // pred_region
      _
    $region21: #{tpu_custom_call.1} parent=1 // pred_fallthru
      _
    // Predicated region
    $region22: #{tpu_custom_call.1} parent=1 // pred_check
      _
    $region23: #{tpu_custom_call.1} parent=1 // pred_check_branch
      %33 = sbr.rel (0) target = $region25
    $region24: #{tpu_custom_call.1} parent=1 // pred_region
      %s35 = ssub.s32 512, 512
      %36 = vsyncadd [#allocation5], %s35
      %s37 = sshll.u32 [#allocation4], 4
      %s38 = int_to_ptr.vmem [resolvable:$true] %s37
      %43 = dma.hbm_to_vmem [thread:$0]  %s5, 512, %s38, [#allocation5], 128, 128, 8
    $region25: #{tpu_custom_call.1} parent=1 // pred_fallthru
      _
    // Predicated region
    $region26: #{tpu_custom_call.1} parent=1 // pred_check
      _
    $region27: #{tpu_custom_call.1} parent=1 // pred_check_branch
      %45 = sbr.rel (0) target = $region29
    $region28: #{tpu_custom_call.1} parent=1 // pred_region
      _
    $region29: #{tpu_custom_call.1} parent=1 // pred_fallthru
      _
    // Predicated region
    $region30: #{tpu_custom_call.1} parent=1 // pred_check
      _
    $region31: #{tpu_custom_call.1} parent=1 // pred_check_branch
      %47 = sbr.rel (0) target = $region33
    $region32: #{tpu_custom_call.1} parent=1 // pred_region
      %48 = dma.done [#allocation3], 64
    $region33: #{tpu_custom_call.1} parent=1 // pred_fallthru
      _
    // Predicated region
    $region34: #{tpu_custom_call.1} parent=1 // pred_check
      _
    $region35: #{tpu_custom_call.1} parent=1 // pred_check_branch
      %50 = sbr.rel (0) target = $region37
    $region36: #{tpu_custom_call.1} parent=1 // pred_region
      %51 = dma.done [#allocation5], 512
    $region37: #{tpu_custom_call.1} parent=1 // pred_fallthru
      _
    %v52 = vld [vmem:[%s0] sm:$0xff]
    %v53 = vld [vmem:[#allocation2] sm:$0xf]
    %v54 = vld [vmem:[%s2] sm:$0x1]
    %v56 = vlaneseq
    %v57 = vshrl.u32 %v56, 7
    %v58 = vsub.s32 0, %v57
    %v59 = vrot.slane %v54, %v58
    %vm61 = vcmask 31744
    %v63 = vsel %vm61, %v52, 0
    %vm65 = vcmask 1043456
    %v67 = vsel %vm65, %v53, 0
    %69 = vmatprep.subr.mxu0 0.0
    %70 = vmatpush1.msra.mxu0 0.0
    %71 = vmatprep.subr.mxu0 0.0
    %72 = vmatpush1.msra.mxu0 0.0
    %73 = vmatprep.subr.mxu0 0.0
    %74 = vmatpush1.msra.mxu0 0.0
    %75 = vmatprep.subr.mxu0 0.0
    %76 = vmatpush1.msra.mxu0 0.0
    %77 = vmatprep.subr.mxu0 0.0
    %78 = vmatpush1.msra.mxu0 0.0
    %79 = vmatprep.subr.mxu0 0.0
    %80 = vmatpush1.msra.mxu0 0.0
    %81 = vmatprep.subr.mxu0 0.0
    %82 = vmatpush1.msra.mxu0 0.0
    %83 = vmatprep.subr.mxu0 0.0
    %84 = vmatpush1.msra.mxu0 0.0
    %85 = vmatprep.subr.mxu0 0.0
    %86 = vmatpush1.msra.mxu0 0.0
    %87 = vmatprep.subr.mxu0 0.0
    %88 = vmatpush1.msra.mxu0 0.0
    %89 = vmatprep.subr.mxu0 0.0
    %90 = vmatpush1.msra.mxu0 0.0
    %91 = vmatprep.subr.mxu0 0.0
    %92 = vmatpush1.msra.mxu0 0.0
    %93 = vmatprep.subr.mxu0 0.0
    %94 = vmatpush1.msra.mxu0 0.0
    %95 = vmatprep.subr.mxu0 0.0
    %96 = vmatpush1.msra.mxu0 0.0
    %97 = vmatprep.subr.mxu0 0.0
    %98 = vmatpush1.msra.mxu0 0.0
    %99 = vmatprep.subr.mxu0 0.0
    %100 = vmatpush1.msra.mxu0 %v67
    %101 = vmatprep.subr.mxu0 0.0
    %102 = vmatpush2.msra.mxu0 0.0
    %103 = vmatprep.subr.mxu0 0.0
    %104 = vmatpush2.msra.mxu0 0.0
    %105 = vmatprep.subr.mxu0 0.0
    %106 = vmatpush2.msra.mxu0 0.0
    %107 = vmatprep.subr.mxu0 0.0
    %108 = vmatpush2.msra.mxu0 0.0
    %109 = vmatprep.subr.mxu0 0.0
    %110 = vmatpush2.msra.mxu0 0.0
    %111 = vmatprep.subr.mxu0 0.0
    %112 = vmatpush2.msra.mxu0 0.0
    %113 = vmatprep.subr.mxu0 0.0
    %114 = vmatpush2.msra.mxu0 0.0
    %115 = vmatprep.subr.mxu0 0.0
    %116 = vmatpush2.msra.mxu0 0.0
    %117 = vmatprep.subr.mxu0 0.0
    %118 = vmatpush2.msra.mxu0 0.0
    %119 = vmatprep.subr.mxu0 0.0
    %120 = vmatpush2.msra.mxu0 0.0
    %121 = vmatprep.subr.mxu0 0.0
    %122 = vmatpush2.msra.mxu0 0.0
    %123 = vmatprep.subr.mxu0 0.0
    %124 = vmatpush2.msra.mxu0 0.0
    %125 = vmatprep.subr.mxu0 0.0
    %126 = vmatpush2.msra.mxu0 0.0
    %127 = vmatprep.subr.mxu0 0.0
    %128 = vmatpush2.msra.mxu0 0.0
    %129 = vmatprep.subr.mxu0 0.0
    %130 = vmatpush2.msra.mxu0 0.0
    %131 = vmatprep.subr.mxu0 0.0
    %132 = vmatpush2.msra.mxu0 0.0
    %133 = vmatprep.mubr.f32.mxu0 0.0
    %134 = vmatmul.mubr.f32.gmra.mxu0 %v63
    %v135 = vpop.f32.mrf.mxu0
    %v136 = vadd.f32 %v59, %v135
    %v137 = vpop.f32.mrf.mxu0
    %138 = vdwg.mxu0
    %v139 = vtanh.pop %v136
    %v140 = vld [vmem:[%s3] sm:$0xff]
    %v141 = vld [vmem:[%s3 + $0x8] sm:$0xff]
    %v142 = vld [vmem:[%s4] sm:$0x1]
    %v144 = vlaneseq
    %v145 = vshrl.u32 %v144, 7
    %v146 = vsub.s32 0, %v145
    %v147 = vrot.slane %v142, %v146
    %vm149 = vcmask 130048
    %v151 = vsel %vm149, %v139, 0
    %153 = vmatprep.subr.mxu0 0.0
    %154 = vmatpush1.msra.mxu0 0.0
    %155 = vmatprep.subr.mxu0 0.0
    %156 = vmatpush1.msra.mxu0 0.0
    %157 = vmatprep.subr.mxu0 0.0
    %158 = vmatpush1.msra.mxu0 0.0
    %159 = vmatprep.subr.mxu0 0.0
    %160 = vmatpush1.msra.mxu0 0.0
    %161 = vmatprep.subr.mxu0 0.0
    %162 = vmatpush1.msra.mxu0 0.0
    %163 = vmatprep.subr.mxu0 0.0
    %164 = vmatpush1.msra.mxu0 0.0
    %165 = vmatprep.subr.mxu0 0.0
    %166 = vmatpush1.msra.mxu0 0.0
    %167 = vmatprep.subr.mxu0 0.0
    %168 = vmatpush1.msra.mxu0 0.0
    %169 = vmatprep.subr.mxu0 0.0
    %170 = vmatpush1.msra.mxu0 0.0
    %171 = vmatprep.subr.mxu0 0.0
    %172 = vmatpush1.msra.mxu0 0.0
    %173 = vmatprep.subr.mxu0 0.0
    %174 = vmatpush1.msra.mxu0 0.0
    %175 = vmatprep.subr.mxu0 0.0
    %176 = vmatpush1.msra.mxu0 0.0
    %177 = vmatprep.subr.mxu0 0.0
    %178 = vmatpush1.msra.mxu0 0.0
    %179 = vmatprep.subr.mxu0 0.0
    %180 = vmatpush1.msra.mxu0 0.0
    %181 = vmatprep.subr.mxu0 0.0
    %182 = vmatpush1.msra.mxu0 %v141
    %183 = vmatprep.subr.mxu0 0.0
    %184 = vmatpush1.msra.mxu0 %v140
    %185 = vmatprep.subr.mxu0 0.0
    %186 = vmatpush2.msra.mxu0 0.0
    %187 = vmatprep.subr.mxu0 0.0
    %188 = vmatpush2.msra.mxu0 0.0
    %189 = vmatprep.subr.mxu0 0.0
    %190 = vmatpush2.msra.mxu0 0.0
    %191 = vmatprep.subr.mxu0 0.0
    %192 = vmatpush2.msra.mxu0 0.0
    %193 = vmatprep.subr.mxu0 0.0
    %194 = vmatpush2.msra.mxu0 0.0
    %195 = vmatprep.subr.mxu0 0.0
    %196 = vmatpush2.msra.mxu0 0.0
    %197 = vmatprep.subr.mxu0 0.0
    %198 = vmatpush2.msra.mxu0 0.0
    %199 = vmatprep.subr.mxu0 0.0
    %200 = vmatpush2.msra.mxu0 0.0
    %201 = vmatprep.subr.mxu0 0.0
    %202 = vmatpush2.msra.mxu0 0.0
    %203 = vmatprep.subr.mxu0 0.0
    %204 = vmatpush2.msra.mxu0 0.0
    %205 = vmatprep.subr.mxu0 0.0
    %206 = vmatpush2.msra.mxu0 0.0
    %207 = vmatprep.subr.mxu0 0.0
    %208 = vmatpush2.msra.mxu0 0.0
    %209 = vmatprep.subr.mxu0 0.0
    %210 = vmatpush2.msra.mxu0 0.0
    %211 = vmatprep.subr.mxu0 0.0
    %212 = vmatpush2.msra.mxu0 0.0
    %213 = vmatprep.subr.mxu0 0.0
    %214 = vmatpush2.msra.mxu0 0.0
    %215 = vmatprep.subr.mxu0 0.0
    %216 = vmatpush2.msra.mxu0 0.0
    %217 = vmatprep.mubr.f32.mxu0 0.0
    %218 = vmatmul.mubr.f32.gmra.mxu0 %v151
    %v219 = vpop.f32.mrf.mxu0
    %v220 = vadd.f32 %v147, %v219
    %v221 = vpop.f32.mrf.mxu0
    %222 = vdwg.mxu0
    %v223 = vtanh.pop %v220
    %v224 = vld [vmem:[#allocation4] sm:$0xff]
    %v225 = vld [vmem:[#allocation4 + $0x8] sm:$0xff]
    %v226 = vld [vmem:[#allocation4 + $0x10] sm:$0xff]
    %v227 = vld [vmem:[#allocation4 + $0x18] sm:$0xff]
    %v228 = vld [vmem:[%s6] sm:$0x1]
    %v230 = vlaneseq
    %v231 = vshrl.u32 %v230, 7
    %v232 = vsub.s32 0, %v231
    %v233 = vrot.slane %v228, %v232
    %vm235 = vcmask 261120
    %v237 = vsel %vm235, %v223, 0
    %239 = vmatprep.subr.mxu0 0.0
    %240 = vmatpush1.msra.mxu0 0.0
    %241 = vmatprep.subr.mxu0 0.0
    %242 = vmatpush1.msra.mxu0 0.0
    %243 = vmatprep.subr.mxu0 0.0
    %244 = vmatpush1.msra.mxu0 0.0
    %245 = vmatprep.subr.mxu0 0.0
    %246 = vmatpush1.msra.mxu0 0.0
    %247 = vmatprep.subr.mxu0 0.0
    %248 = vmatpush1.msra.mxu0 0.0
    %249 = vmatprep.subr.mxu0 0.0
    %250 = vmatpush1.msra.mxu0 0.0
    %251 = vmatprep.subr.mxu0 0.0
    %252 = vmatpush1.msra.mxu0 0.0
    %253 = vmatprep.subr.mxu0 0.0
    %254 = vmatpush1.msra.mxu0 0.0
    %255 = vmatprep.subr.mxu0 0.0
    %256 = vmatpush1.msra.mxu0 0.0
    %257 = vmatprep.subr.mxu0 0.0
    %258 = vmatpush1.msra.mxu0 0.0
    %259 = vmatprep.subr.mxu0 0.0
    %260 = vmatpush1.msra.mxu0 0.0
    %261 = vmatprep.subr.mxu0 0.0
    %262 = vmatpush1.msra.mxu0 0.0
    %263 = vmatprep.subr.mxu0 0.0
    %264 = vmatpush1.msra.mxu0 %v227
    %265 = vmatprep.subr.mxu0 0.0
    %266 = vmatpush1.msra.mxu0 %v226
    %267 = vmatprep.subr.mxu0 0.0
    %268 = vmatpush1.msra.mxu0 %v225
    %269 = vmatprep.subr.mxu0 0.0
    %270 = vmatpush1.msra.mxu0 %v224
    %271 = vmatprep.subr.mxu0 0.0
    %272 = vmatpush2.msra.mxu0 0.0
    %273 = vmatprep.subr.mxu0 0.0
    %274 = vmatpush2.msra.mxu0 0.0
    %275 = vmatprep.subr.mxu0 0.0
    %276 = vmatpush2.msra.mxu0 0.0
    %277 = vmatprep.subr.mxu0 0.0
    %278 = vmatpush2.msra.mxu0 0.0
    %279 = vmatprep.subr.mxu0 0.0
    %280 = vmatpush2.msra.mxu0 0.0
    %281 = vmatprep.subr.mxu0 0.0
    %282 = vmatpush2.msra.mxu0 0.0
    %283 = vmatprep.subr.mxu0 0.0
    %284 = vmatpush2.msra.mxu0 0.0
    %285 = vmatprep.subr.mxu0 0.0
    %286 = vmatpush2.msra.mxu0 0.0
    %287 = vmatprep.subr.mxu0 0.0
    %288 = vmatpush2.msra.mxu0 0.0
    %289 = vmatprep.subr.mxu0 0.0
    %290 = vmatpush2.msra.mxu0 0.0
    %291 = vmatprep.subr.mxu0 0.0
    %292 = vmatpush2.msra.mxu0 0.0
    %293 = vmatprep.subr.mxu0 0.0
    %294 = vmatpush2.msra.mxu0 0.0
    %295 = vmatprep.subr.mxu0 0.0
    %296 = vmatpush2.msra.mxu0 0.0
    %297 = vmatprep.subr.mxu0 0.0
    %298 = vmatpush2.msra.mxu0 0.0
    %299 = vmatprep.subr.mxu0 0.0
    %300 = vmatpush2.msra.mxu0 0.0
    %301 = vmatprep.subr.mxu0 0.0
    %302 = vmatpush2.msra.mxu0 0.0
    %303 = vmatprep.mubr.f32.mxu0 0.0
    %304 = vmatmul.mubr.f32.gmra.mxu0 %v237
    %v305 = vpop.f32.mrf.mxu0
    %v306 = vadd.f32 %v233, %v305
    %v307 = vpop.f32.mrf.mxu0
    %308 = vdwg.mxu0
    %v309 = vtanh.pop %v306
    %v310 = vlaneseq
    %v311 = vand.u32 %v310, 127
    %vm312 = vcmp.lt.s32.totalorder %v311, 2
    %v313 = vsel %vm312, %v309, -1e+30
    %314 = vmax.xlane.f32.xlu0 %v313
    %v315 = vpop.xlane.xlu0 %314
    %v316 = vsub.f32 %v313, %v315
    %v317 = vmul.f32 %v316, 1.442695
    %v318 = vpow.pop %v317
    %319 = vadd.xlane.f32.xlu0 %v318
    %v320 = vpop.xlane.xlu0 %319
    %v321 = vrcp.pop %v320
    %v322 = vmul.f32 %v318, %v321
    %vm323 = vcmask 15360
    %324 = vst.msk [vmem:[%s7] sm:$0xff] %vm323, %v322
    // Predicated region
    $region38: #{tpu_custom_call.1} parent=1 // pred_check
      _
    $region39: #{tpu_custom_call.1} parent=1 // pred_check_branch
      %326 = sbr.rel (0) target = $region41
    $region40: #{tpu_custom_call.1} parent=1 // pred_region
      _
    $region41: #{tpu_custom_call.1} parent=1 // pred_fallthru
      _
    // Predicated region
    $region42: #{tpu_custom_call.1} parent=1 // pred_check
      _
    $region43: #{tpu_custom_call.1} parent=1 // pred_check_branch
      %328 = sbr.rel (0) target = $region45
    $region44: #{tpu_custom_call.1} parent=1 // pred_region
      _
    $region45: #{tpu_custom_call.1} parent=1 // pred_fallthru
      _
    %329 = vsyncpa [#allocation3], 1
    %330 = vsyncpa [#allocation5], 1

</llo_original>
